<compile_context>
chip_gen: v5e
topology: v5e:2x2
jax: 0.10.0
libtpu: 0.0.40
codegen_flags: <defaults>
</compile_context>

<pallas_src>
import functools

import jax
import jax.numpy as jnp
import numpy as np
from jax import lax
from jax.experimental import pallas as pl
from jax.experimental.pallas import tpu as pltpu

SELU_ALPHA = 1.6732632423543772
SELU_SCALE = 1.0507009873554805
THRESH = 0.5          # LIFactFun default thresh
LANE = 128
SUBLANE = 8


def _round_up(x, m):
    return (x + m - 1) // m * m


def liafr_recurrence_kernel(t_chunk, decay_ref, oi_ref, w2_ref, out_ref, v_ref):
    """Recurrent part of LIAFRCell; one grid step == T_CHUNK time steps.

    decay_ref : SMEM (1,) f32                      scalar prefetch
    oi_ref    : VMEM (T_CHUNK, Bs, Hp)             output_init slab (b1+b2 folded in)
    w2_ref    : VMEM (Hp, Hp)                      kernel_v weight (pre-transposed, resident)
    out_ref   : VMEM (T_CHUNK, Bs, Hp)             selu(v) outputs, time-major
    v_ref     : VMEM (Bs, Hp)                      membrane potential carried across chunks
    """
    tc = pl.program_id(1)

    @pl.when(tc == 0)
    def _():
        v_ref[...] = jnp.zeros_like(v_ref)

    decay = decay_ref[0]
    w2 = w2_ref[...]

    def step(i, v):
        # v = output_init[t] + v @ W2^T   (+ b2 already folded into output_init)
        v = oi_ref[i] + jnp.dot(v, w2, preferred_element_type=jnp.float32)
        fire = (v > THRESH).astype(jnp.float32)
        # selu(v); clamp the exp argument so the discarded branch never overflows.
        out_ref[i] = SELU_SCALE * jnp.where(
            v > 0.0, v, SELU_ALPHA * (jnp.exp(jnp.minimum(v, 0.0)) - 1.0))
        # v = decay * (1 - fire) * v
        return decay * (1.0 - fire) * v

    v_ref[...] = lax.fori_loop(0, t_chunk, step, v_ref[...], unroll=True)


@functools.partial(jax.jit, static_argnames=("t_chunk", "num_batch_shards"))
def liafr_cell_forward(x, w1, b1, w2, b2, decay, *, t_chunk=8, num_batch_shards=1):
    """x: (B, T, In) f32; w1: (H, In); b1: (H,); w2: (H, H); b2: (H,); decay: (1,).

    num_batch_shards > 1 shards the (independent-per-row) recurrence across
    TensorCores on v7x; keep 1 on single-TC v5e/v6e or when B is small.
    """
    B, T, In = x.shape
    H = w1.shape[0]

    Tc = min(t_chunk, T)                         # time steps per grid iteration
    Tp = _round_up(T, Tc)                        # padded time (extra steps are inert)
    Hp = _round_up(H, LANE)                      # lane-dense hidden dim
    Bp = _round_up(B, SUBLANE * num_batch_shards)  # sublane-dense batch dim
    Bs = Bp // num_batch_shards

    x = x.astype(jnp.float32)
    w1t = jnp.transpose(w1).astype(jnp.float32)              # (In, H)
    w2t = jnp.transpose(w2).astype(jnp.float32)              # (H, H)
    bias = (b1 + b2).astype(jnp.float32)                     # fold b2 into projection bias
    decay = decay.reshape(1).astype(jnp.float32)

    # Hoisted projection: one big MXU-friendly matmul for all (B, T) rows at once,
    # produced directly in time-major layout (no standalone transpose of x in HBM).
    oi = jnp.einsum("bti,ih->tbh", x, w1t) + bias             # (T, B, H)

    # Zero-pad to dense tile shapes. Padded H columns / B rows / T steps stay exactly
    # zero through the recurrence (W2 padding is zero) and are sliced off at the end.
    oi = jnp.pad(oi, ((0, Tp - T), (0, Bp - B), (0, Hp - H)))
    w2t_p = jnp.pad(w2t, ((0, Hp - H), (0, Hp - H)))

    kernel = functools.partial(liafr_recurrence_kernel, Tc)

    out_tmajor = pl.pallas_call(
        kernel,
        out_shape=jax.ShapeDtypeStruct((Tp, Bp, Hp), jnp.float32),
        grid_spec=pltpu.PrefetchScalarGridSpec(
            num_scalar_prefetch=1,                             # decay -> SMEM
            grid=(num_batch_shards, Tp // Tc),
            in_specs=[
                pl.BlockSpec((Tc, Bs, Hp), lambda b, t, d: (t, b, 0)),  # output_init slab
                pl.BlockSpec((Hp, Hp), lambda b, t, d: (0, 0)),         # W2^T (VMEM resident)
            ],
            out_specs=pl.BlockSpec((Tc, Bs, Hp), lambda b, t, d: (t, b, 0)),
            scratch_shapes=[pltpu.VMEM((Bs, Hp), jnp.float32)],         # membrane v carry
        ),
        compiler_params=pltpu.CompilerParams(
            # batch shards are independent (megacore on v7x); time must stay sequential
            dimension_semantics=("parallel", "arbitrary"),
        ),
    )(decay, oi, w2t_p)

    # Single final transpose of the (small) output, then strip padding.
    return jnp.transpose(out_tmajor, (1, 0, 2))[:B, :T, :H]


def liafr_cell_reference(x, w1, b1, w2, b2, decay):
    """Pure-JAX reference mirroring the PyTorch forward."""
    B, T, In = x.shape
    H = w1.shape[0]
    output_init = jnp.einsum("bti,hi->bth", x, w1) + b1        # nn.Linear kernel
    v = jnp.zeros((B, H), dtype=jnp.float32)
    outs = []
    for t in range(T):
        v = output_init[:, t, :] + v @ w2.T + b2               # nn.Linear kernel_v
        fire = (v > THRESH).astype(jnp.float32)
        outs.append(SELU_SCALE * jnp.where(v > 0.0, v, SELU_ALPHA * (jnp.exp(v) - 1.0)))
        v = decay * (1.0 - fire) * v
    return jnp.stack(outs, axis=1)


if __name__ == "__main__":
    B, T, IN_SIZE, HIDDEN = 2, 8, 16, 32

    key = jax.random.PRNGKey(0)
    kx, kw1, kb1, kw2, kb2 = jax.random.split(key, 5)

    x = jax.random.normal(kx, (B, T, IN_SIZE), dtype=jnp.float32)
    # Deterministic synthetic parameters (shapes match nn.Linear(in, hidden)).
    w1 = jax.random.normal(kw1, (HIDDEN, IN_SIZE), dtype=jnp.float32) * 0.2
    b1 = jax.random.normal(kb1, (HIDDEN,), dtype=jnp.float32) * 0.1
    w2 = jax.random.normal(kw2, (HIDDEN, HIDDEN), dtype=jnp.float32) * 0.2
    b2 = jax.random.normal(kb2, (HIDDEN,), dtype=jnp.float32) * 0.1
    decay = jnp.array([0.5], dtype=jnp.float32)                 # nn.Parameter(ones(1)*0.5)

    out = liafr_cell_forward(x, w1, b1, w2, b2, decay)
    out = jax.block_until_ready(out)

    ref = liafr_cell_reference(x, w1, b1, w2, b2, decay)
    np.testing.assert_allclose(np.asarray(out), np.asarray(ref), rtol=1e-4, atol=1e-5)

    print("KERNEL_OK")
</pallas_src>

<mosaic_0001>
module attributes {stable_mosaic.version = 11 : i64} {
  func.func @liafr_recurrence_kernel(%arg0: i32, %arg1: i32, %arg2: memref<1xf32, #tpu.memory_space<smem>>, %arg3: memref<8x8x128xf32, #tpu.memory_space<vmem>>, %arg4: memref<128x128xf32, #tpu.memory_space<vmem>>, %arg5: memref<8x8x128xf32, #tpu.memory_space<vmem>>, %arg6: memref<8x128xf32, #tpu.memory_space<vmem>>) attributes {dimension_semantics = [#tpu.dimension_semantics<parallel>, #tpu.dimension_semantics<arbitrary>], iteration_bounds = array<i64: 1, 1>, scalar_prefetch = 1 : i64, scratch_operands = 1 : i64, tpu.core_type = #tpu.core_type<tc>, window_params = [{transform_indices = @transform_0, window_bounds = array<i64: 8, 8, 128>}, {pipeline_mode = #tpu.pipeline_mode<synchronous>, transform_indices = @transform_1, window_bounds = array<i64: 128, 128>}, {transform_indices = @transform_2, window_bounds = array<i64: 8, 8, 128>}]} {
    %c0_i32 = arith.constant 0 : i32
    %0 = arith.cmpi eq, %arg1, %c0_i32 : i32
    %1 = arith.extui %0 : i1 to i32
    %c0_i32_0 = arith.constant 0 : i32
    %2 = arith.cmpi ne, %1, %c0_i32_0 : i32
    scf.if %2 {
      %cst_103 = arith.constant 0.000000e+00 : f32
      %247 = vector.broadcast %cst_103 : f32 to vector<8x128xf32>
      %c0_104 = arith.constant 0 : index
      %c0_105 = arith.constant 0 : index
      %248 = vector.load %arg6[%c0_104, %c0_105] : memref<8x128xf32, #tpu.memory_space<vmem>>, vector<8x128xf32>
      tpu.vector_store %arg6[%c0_104, %c0_105], %247 {strides = array<i32>} : memref<8x128xf32, #tpu.memory_space<vmem>>, vector<8x128xf32>,
    } else {
    }
    %c0 = arith.constant 0 : index
    %3 = memref.load %arg2[%c0] : memref<1xf32, #tpu.memory_space<smem>>
    %c0_1 = arith.constant 0 : index
    %c0_2 = arith.constant 0 : index
    %4 = vector.load %arg4[%c0_1, %c0_2] : memref<128x128xf32, #tpu.memory_space<vmem>>, vector<128x128xf32>
    %c0_3 = arith.constant 0 : index
    %c0_4 = arith.constant 0 : index
    %5 = vector.load %arg6[%c0_3, %c0_4] : memref<8x128xf32, #tpu.memory_space<vmem>>, vector<8x128xf32>
    %c0_i32_5 = arith.constant 0 : i32
    %6 = arith.index_cast %c0_i32_5 : i32 to index
    %c0_6 = arith.constant 0 : index
    %c0_7 = arith.constant 0 : index
    %7 = vector.load %arg3[%6, %c0_6, %c0_7] : memref<8x8x128xf32, #tpu.memory_space<vmem>>, vector<1x8x128xf32>
    %8 = vector.shape_cast %7 : vector<1x8x128xf32> to vector<8x128xf32>
    %cst = arith.constant dense<0.000000e+00> : vector<8x128xf32>
    %9 = tpu.matmul %5, %4, %cst {dimension_numbers = #tpu.dot_dimension_numbers<[1], [0], [0], [1], [0, 0, 1, 1], [], []>} : vector<8x128xf32>, vector<128x128xf32>, vector<8x128xf32> -> vector<8x128xf32>
    %10 = arith.addf %8, %9 : vector<8x128xf32>
    %cst_8 = arith.constant 5.000000e-01 : f32
    %11 = vector.broadcast %cst_8 : f32 to vector<8x128xf32>
    %12 = arith.cmpf ogt, %10, %11 : vector<8x128xf32>
    %13 = arith.extui %12 : vector<8x128xi1> to vector<8x128xi32>
    %14 = arith.sitofp %13 : vector<8x128xi32> to vector<8x128xf32>
    %cst_9 = arith.constant 0.000000e+00 : f32
    %15 = vector.broadcast %cst_9 : f32 to vector<8x128xf32>
    %16 = arith.cmpf ogt, %10, %15 : vector<8x128xf32>
    %cst_10 = arith.constant 0.000000e+00 : f32
    %17 = vector.broadcast %cst_10 : f32 to vector<8x128xf32>
    %18 = arith.minimumf %10, %17 : vector<8x128xf32>
    %19 = math.exp %18 : vector<8x128xf32>
    %cst_11 = arith.constant 1.000000e+00 : f32
    %20 = vector.broadcast %cst_11 : f32 to vector<8x128xf32>
    %21 = arith.subf %19, %20 : vector<8x128xf32>
    %cst_12 = arith.constant 1.67326319 : f32
    %22 = vector.broadcast %cst_12 : f32 to vector<8x128xf32>
    %23 = arith.mulf %22, %21 : vector<8x128xf32>
    %24 = arith.select %16, %10, %23 : vector<8x128xi1>, vector<8x128xf32>
    %cst_13 = arith.constant 1.05070102 : f32
    %25 = vector.broadcast %cst_13 : f32 to vector<8x128xf32>
    %26 = arith.mulf %25, %24 : vector<8x128xf32>
    %27 = arith.index_cast %c0_i32_5 : i32 to index
    %c0_14 = arith.constant 0 : index
    %c0_15 = arith.constant 0 : index
    %28 = vector.load %arg5[%27, %c0_14, %c0_15] : memref<8x8x128xf32, #tpu.memory_space<vmem>>, vector<1x8x128xf32>
    %29 = vector.shape_cast %28 : vector<1x8x128xf32> to vector<8x128xf32>
    %30 = vector.shape_cast %26 : vector<8x128xf32> to vector<1x8x128xf32>
    tpu.vector_store %arg5[%27, %c0_14, %c0_15], %30 {strides = array<i32>} : memref<8x8x128xf32, #tpu.memory_space<vmem>>, vector<1x8x128xf32>,
    %cst_16 = arith.constant 1.000000e+00 : f32
    %31 = vector.broadcast %cst_16 : f32 to vector<8x128xf32>
    %32 = arith.subf %31, %14 : vector<8x128xf32>
    %33 = vector.broadcast %3 : f32 to vector<8x128xf32>
    %34 = arith.mulf %33, %32 : vector<8x128xf32>
    %35 = arith.mulf %34, %10 : vector<8x128xf32>
    %c1_i32 = arith.constant 1 : i32
    %36 = arith.index_cast %c1_i32 : i32 to index
    %c0_17 = arith.constant 0 : index
    %c0_18 = arith.constant 0 : index
    %37 = vector.load %arg3[%36, %c0_17, %c0_18] : memref<8x8x128xf32, #tpu.memory_space<vmem>>, vector<1x8x128xf32>
    %38 = vector.shape_cast %37 : vector<1x8x128xf32> to vector<8x128xf32>
    %cst_19 = arith.constant dense<0.000000e+00> : vector<8x128xf32>
    %39 = tpu.matmul %35, %4, %cst_19 {dimension_numbers = #tpu.dot_dimension_numbers<[1], [0], [0], [1], [0, 0, 1, 1], [], []>} : vector<8x128xf32>, vector<128x128xf32>, vector<8x128xf32> -> vector<8x128xf32>
    %40 = arith.addf %38, %39 : vector<8x128xf32>
    %cst_20 = arith.constant 5.000000e-01 : f32
    %41 = vector.broadcast %cst_20 : f32 to vector<8x128xf32>
    %42 = arith.cmpf ogt, %40, %41 : vector<8x128xf32>
    %43 = arith.extui %42 : vector<8x128xi1> to vector<8x128xi32>
    %44 = arith.sitofp %43 : vector<8x128xi32> to vector<8x128xf32>
    %cst_21 = arith.constant 0.000000e+00 : f32
    %45 = vector.broadcast %cst_21 : f32 to vector<8x128xf32>
    %46 = arith.cmpf ogt, %40, %45 : vector<8x128xf32>
    %cst_22 = arith.constant 0.000000e+00 : f32
    %47 = vector.broadcast %cst_22 : f32 to vector<8x128xf32>
    %48 = arith.minimumf %40, %47 : vector<8x128xf32>
    %49 = math.exp %48 : vector<8x128xf32>
    %cst_23 = arith.constant 1.000000e+00 : f32
    %50 = vector.broadcast %cst_23 : f32 to vector<8x128xf32>
    %51 = arith.subf %49, %50 : vector<8x128xf32>
    %cst_24 = arith.constant 1.67326319 : f32
    %52 = vector.broadcast %cst_24 : f32 to vector<8x128xf32>
    %53 = arith.mulf %52, %51 : vector<8x128xf32>
    %54 = arith.select %46, %40, %53 : vector<8x128xi1>, vector<8x128xf32>
    %cst_25 = arith.constant 1.05070102 : f32
    %55 = vector.broadcast %cst_25 : f32 to vector<8x128xf32>
    %56 = arith.mulf %55, %54 : vector<8x128xf32>
    %57 = arith.index_cast %c1_i32 : i32 to index
    %c0_26 = arith.constant 0 : index
    %c0_27 = arith.constant 0 : index
    %58 = vector.load %arg5[%57, %c0_26, %c0_27] : memref<8x8x128xf32, #tpu.memory_space<vmem>>, vector<1x8x128xf32>
    %59 = vector.shape_cast %58 : vector<1x8x128xf32> to vector<8x128xf32>
    %60 = vector.shape_cast %56 : vector<8x128xf32> to vector<1x8x128xf32>
    tpu.vector_store %arg5[%57, %c0_26, %c0_27], %60 {strides = array<i32>} : memref<8x8x128xf32, #tpu.memory_space<vmem>>, vector<1x8x128xf32>,
    %cst_28 = arith.constant 1.000000e+00 : f32
    %61 = vector.broadcast %cst_28 : f32 to vector<8x128xf32>
    %62 = arith.subf %61, %44 : vector<8x128xf32>
    %63 = vector.broadcast %3 : f32 to vector<8x128xf32>
    %64 = arith.mulf %63, %62 : vector<8x128xf32>
    %65 = arith.mulf %64, %40 : vector<8x128xf32>
    %c2_i32 = arith.constant 2 : i32
    %66 = arith.index_cast %c2_i32 : i32 to index
    %c0_29 = arith.constant 0 : index
    %c0_30 = arith.constant 0 : index
    %67 = vector.load %arg3[%66, %c0_29, %c0_30] : memref<8x8x128xf32, #tpu.memory_space<vmem>>, vector<1x8x128xf32>
    %68 = vector.shape_cast %67 : vector<1x8x128xf32> to vector<8x128xf32>
    %cst_31 = arith.constant dense<0.000000e+00> : vector<8x128xf32>
    %69 = tpu.matmul %65, %4, %cst_31 {dimension_numbers = #tpu.dot_dimension_numbers<[1], [0], [0], [1], [0, 0, 1, 1], [], []>} : vector<8x128xf32>, vector<128x128xf32>, vector<8x128xf32> -> vector<8x128xf32>
    %70 = arith.addf %68, %69 : vector<8x128xf32>
    %cst_32 = arith.constant 5.000000e-01 : f32
    %71 = vector.broadcast %cst_32 : f32 to vector<8x128xf32>
    %72 = arith.cmpf ogt, %70, %71 : vector<8x128xf32>
    %73 = arith.extui %72 : vector<8x128xi1> to vector<8x128xi32>
    %74 = arith.sitofp %73 : vector<8x128xi32> to vector<8x128xf32>
    %cst_33 = arith.constant 0.000000e+00 : f32
    %75 = vector.broadcast %cst_33 : f32 to vector<8x128xf32>
    %76 = arith.cmpf ogt, %70, %75 : vector<8x128xf32>
    %cst_34 = arith.constant 0.000000e+00 : f32
    %77 = vector.broadcast %cst_34 : f32 to vector<8x128xf32>
    %78 = arith.minimumf %70, %77 : vector<8x128xf32>
    %79 = math.exp %78 : vector<8x128xf32>
    %cst_35 = arith.constant 1.000000e+00 : f32
    %80 = vector.broadcast %cst_35 : f32 to vector<8x128xf32>
    %81 = arith.subf %79, %80 : vector<8x128xf32>
    %cst_36 = arith.constant 1.67326319 : f32
    %82 = vector.broadcast %cst_36 : f32 to vector<8x128xf32>
    %83 = arith.mulf %82, %81 : vector<8x128xf32>
    %84 = arith.select %76, %70, %83 : vector<8x128xi1>, vector<8x128xf32>
    %cst_37 = arith.constant 1.05070102 : f32
    %85 = vector.broadcast %cst_37 : f32 to vector<8x128xf32>
    %86 = arith.mulf %85, %84 : vector<8x128xf32>
    %87 = arith.index_cast %c2_i32 : i32 to index
    %c0_38 = arith.constant 0 : index
    %c0_39 = arith.constant 0 : index
    %88 = vector.load %arg5[%87, %c0_38, %c0_39] : memref<8x8x128xf32, #tpu.memory_space<vmem>>, vector<1x8x128xf32>
    %89 = vector.shape_cast %88 : vector<1x8x128xf32> to vector<8x128xf32>
    %90 = vector.shape_cast %86 : vector<8x128xf32> to vector<1x8x128xf32>
    tpu.vector_store %arg5[%87, %c0_38, %c0_39], %90 {strides = array<i32>} : memref<8x8x128xf32, #tpu.memory_space<vmem>>, vector<1x8x128xf32>,
    %cst_40 = arith.constant 1.000000e+00 : f32
    %91 = vector.broadcast %cst_40 : f32 to vector<8x128xf32>
    %92 = arith.subf %91, %74 : vector<8x128xf32>
    %93 = vector.broadcast %3 : f32 to vector<8x128xf32>
    %94 = arith.mulf %93, %92 : vector<8x128xf32>
    %95 = arith.mulf %94, %70 : vector<8x128xf32>
    %c3_i32 = arith.constant 3 : i32
    %96 = arith.index_cast %c3_i32 : i32 to index
    %c0_41 = arith.constant 0 : index
    %c0_42 = arith.constant 0 : index
    %97 = vector.load %arg3[%96, %c0_41, %c0_42] : memref<8x8x128xf32, #tpu.memory_space<vmem>>, vector<1x8x128xf32>
    %98 = vector.shape_cast %97 : vector<1x8x128xf32> to vector<8x128xf32>
    %cst_43 = arith.constant dense<0.000000e+00> : vector<8x128xf32>
    %99 = tpu.matmul %95, %4, %cst_43 {dimension_numbers = #tpu.dot_dimension_numbers<[1], [0], [0], [1], [0, 0, 1, 1], [], []>} : vector<8x128xf32>, vector<128x128xf32>, vector<8x128xf32> -> vector<8x128xf32>
    %100 = arith.addf %98, %99 : vector<8x128xf32>
    %cst_44 = arith.constant 5.000000e-01 : f32
    %101 = vector.broadcast %cst_44 : f32 to vector<8x128xf32>
    %102 = arith.cmpf ogt, %100, %101 : vector<8x128xf32>
    %103 = arith.extui %102 : vector<8x128xi1> to vector<8x128xi32>
    %104 = arith.sitofp %103 : vector<8x128xi32> to vector<8x128xf32>
    %cst_45 = arith.constant 0.000000e+00 : f32
    %105 = vector.broadcast %cst_45 : f32 to vector<8x128xf32>
    %106 = arith.cmpf ogt, %100, %105 : vector<8x128xf32>
    %cst_46 = arith.constant 0.000000e+00 : f32
    %107 = vector.broadcast %cst_46 : f32 to vector<8x128xf32>
    %108 = arith.minimumf %100, %107 : vector<8x128xf32>
    %109 = math.exp %108 : vector<8x128xf32>
    %cst_47 = arith.constant 1.000000e+00 : f32
    %110 = vector.broadcast %cst_47 : f32 to vector<8x128xf32>
    %111 = arith.subf %109, %110 : vector<8x128xf32>
    %cst_48 = arith.constant 1.67326319 : f32
    %112 = vector.broadcast %cst_48 : f32 to vector<8x128xf32>
    %113 = arith.mulf %112, %111 : vector<8x128xf32>
    %114 = arith.select %106, %100, %113 : vector<8x128xi1>, vector<8x128xf32>
    %cst_49 = arith.constant 1.05070102 : f32
    %115 = vector.broadcast %cst_49 : f32 to vector<8x128xf32>
    %116 = arith.mulf %115, %114 : vector<8x128xf32>
    %117 = arith.index_cast %c3_i32 : i32 to index
    %c0_50 = arith.constant 0 : index
    %c0_51 = arith.constant 0 : index
    %118 = vector.load %arg5[%117, %c0_50, %c0_51] : memref<8x8x128xf32, #tpu.memory_space<vmem>>, vector<1x8x128xf32>
    %119 = vector.shape_cast %118 : vector<1x8x128xf32> to vector<8x128xf32>
    %120 = vector.shape_cast %116 : vector<8x128xf32> to vector<1x8x128xf32>
    tpu.vector_store %arg5[%117, %c0_50, %c0_51], %120 {strides = array<i32>} : memref<8x8x128xf32, #tpu.memory_space<vmem>>, vector<1x8x128xf32>,
    %cst_52 = arith.constant 1.000000e+00 : f32
    %121 = vector.broadcast %cst_52 : f32 to vector<8x128xf32>
    %122 = arith.subf %121, %104 : vector<8x128xf32>
    %123 = vector.broadcast %3 : f32 to vector<8x128xf32>
    %124 = arith.mulf %123, %122 : vector<8x128xf32>
    %125 = arith.mulf %124, %100 : vector<8x128xf32>
    %c4_i32 = arith.constant 4 : i32
    %126 = arith.index_cast %c4_i32 : i32 to index
    %c0_53 = arith.constant 0 : index
    %c0_54 = arith.constant 0 : index
    %127 = vector.load %arg3[%126, %c0_53, %c0_54] : memref<8x8x128xf32, #tpu.memory_space<vmem>>, vector<1x8x128xf32>
    %128 = vector.shape_cast %127 : vector<1x8x128xf32> to vector<8x128xf32>
    %cst_55 = arith.constant dense<0.000000e+00> : vector<8x128xf32>
    %129 = tpu.matmul %125, %4, %cst_55 {dimension_numbers = #tpu.dot_dimension_numbers<[1], [0], [0], [1], [0, 0, 1, 1], [], []>} : vector<8x128xf32>, vector<128x128xf32>, vector<8x128xf32> -> vector<8x128xf32>
    %130 = arith.addf %128, %129 : vector<8x128xf32>
    %cst_56 = arith.constant 5.000000e-01 : f32
    %131 = vector.broadcast %cst_56 : f32 to vector<8x128xf32>
    %132 = arith.cmpf ogt, %130, %131 : vector<8x128xf32>
    %133 = arith.extui %132 : vector<8x128xi1> to vector<8x128xi32>
    %134 = arith.sitofp %133 : vector<8x128xi32> to vector<8x128xf32>
    %cst_57 = arith.constant 0.000000e+00 : f32
    %135 = vector.broadcast %cst_57 : f32 to vector<8x128xf32>
    %136 = arith.cmpf ogt, %130, %135 : vector<8x128xf32>
    %cst_58 = arith.constant 0.000000e+00 : f32
    %137 = vector.broadcast %cst_58 : f32 to vector<8x128xf32>
    %138 = arith.minimumf %130, %137 : vector<8x128xf32>
    %139 = math.exp %138 : vector<8x128xf32>
    %cst_59 = arith.constant 1.000000e+00 : f32
    %140 = vector.broadcast %cst_59 : f32 to vector<8x128xf32>
    %141 = arith.subf %139, %140 : vector<8x128xf32>
    %cst_60 = arith.constant 1.67326319 : f32
    %142 = vector.broadcast %cst_60 : f32 to vector<8x128xf32>
    %143 = arith.mulf %142, %141 : vector<8x128xf32>
    %144 = arith.select %136, %130, %143 : vector<8x128xi1>, vector<8x128xf32>
    %cst_61 = arith.constant 1.05070102 : f32
    %145 = vector.broadcast %cst_61 : f32 to vector<8x128xf32>
    %146 = arith.mulf %145, %144 : vector<8x128xf32>
    %147 = arith.index_cast %c4_i32 : i32 to index
    %c0_62 = arith.constant 0 : index
    %c0_63 = arith.constant 0 : index
    %148 = vector.load %arg5[%147, %c0_62, %c0_63] : memref<8x8x128xf32, #tpu.memory_space<vmem>>, vector<1x8x128xf32>
    %149 = vector.shape_cast %148 : vector<1x8x128xf32> to vector<8x128xf32>
    %150 = vector.shape_cast %146 : vector<8x128xf32> to vector<1x8x128xf32>
    tpu.vector_store %arg5[%147, %c0_62, %c0_63], %150 {strides = array<i32>} : memref<8x8x128xf32, #tpu.memory_space<vmem>>, vector<1x8x128xf32>,
    %cst_64 = arith.constant 1.000000e+00 : f32
    %151 = vector.broadcast %cst_64 : f32 to vector<8x128xf32>
    %152 = arith.subf %151, %134 : vector<8x128xf32>
    %153 = vector.broadcast %3 : f32 to vector<8x128xf32>
    %154 = arith.mulf %153, %152 : vector<8x128xf32>
    %155 = arith.mulf %154, %130 : vector<8x128xf32>
    %c5_i32 = arith.constant 5 : i32
    %156 = arith.index_cast %c5_i32 : i32 to index
    %c0_65 = arith.constant 0 : index
    %c0_66 = arith.constant 0 : index
    %157 = vector.load %arg3[%156, %c0_65, %c0_66] : memref<8x8x128xf32, #tpu.memory_space<vmem>>, vector<1x8x128xf32>
    %158 = vector.shape_cast %157 : vector<1x8x128xf32> to vector<8x128xf32>
    %cst_67 = arith.constant dense<0.000000e+00> : vector<8x128xf32>
    %159 = tpu.matmul %155, %4, %cst_67 {dimension_numbers = #tpu.dot_dimension_numbers<[1], [0], [0], [1], [0, 0, 1, 1], [], []>} : vector<8x128xf32>, vector<128x128xf32>, vector<8x128xf32> -> vector<8x128xf32>
    %160 = arith.addf %158, %159 : vector<8x128xf32>
    %cst_68 = arith.constant 5.000000e-01 : f32
    %161 = vector.broadcast %cst_68 : f32 to vector<8x128xf32>
    %162 = arith.cmpf ogt, %160, %161 : vector<8x128xf32>
    %163 = arith.extui %162 : vector<8x128xi1> to vector<8x128xi32>
    %164 = arith.sitofp %163 : vector<8x128xi32> to vector<8x128xf32>
    %cst_69 = arith.constant 0.000000e+00 : f32
    %165 = vector.broadcast %cst_69 : f32 to vector<8x128xf32>
    %166 = arith.cmpf ogt, %160, %165 : vector<8x128xf32>
    %cst_70 = arith.constant 0.000000e+00 : f32
    %167 = vector.broadcast %cst_70 : f32 to vector<8x128xf32>
    %168 = arith.minimumf %160, %167 : vector<8x128xf32>
    %169 = math.exp %168 : vector<8x128xf32>
    %cst_71 = arith.constant 1.000000e+00 : f32
    %170 = vector.broadcast %cst_71 : f32 to vector<8x128xf32>
    %171 = arith.subf %169, %170 : vector<8x128xf32>
    %cst_72 = arith.constant 1.67326319 : f32
    %172 = vector.broadcast %cst_72 : f32 to vector<8x128xf32>
    %173 = arith.mulf %172, %171 : vector<8x128xf32>
    %174 = arith.select %166, %160, %173 : vector<8x128xi1>, vector<8x128xf32>
    %cst_73 = arith.constant 1.05070102 : f32
    %175 = vector.broadcast %cst_73 : f32 to vector<8x128xf32>
    %176 = arith.mulf %175, %174 : vector<8x128xf32>
    %177 = arith.index_cast %c5_i32 : i32 to index
    %c0_74 = arith.constant 0 : index
    %c0_75 = arith.constant 0 : index
    %178 = vector.load %arg5[%177, %c0_74, %c0_75] : memref<8x8x128xf32, #tpu.memory_space<vmem>>, vector<1x8x128xf32>
    %179 = vector.shape_cast %178 : vector<1x8x128xf32> to vector<8x128xf32>
    %180 = vector.shape_cast %176 : vector<8x128xf32> to vector<1x8x128xf32>
    tpu.vector_store %arg5[%177, %c0_74, %c0_75], %180 {strides = array<i32>} : memref<8x8x128xf32, #tpu.memory_space<vmem>>, vector<1x8x128xf32>,
    %cst_76 = arith.constant 1.000000e+00 : f32
    %181 = vector.broadcast %cst_76 : f32 to vector<8x128xf32>
    %182 = arith.subf %181, %164 : vector<8x128xf32>
    %183 = vector.broadcast %3 : f32 to vector<8x128xf32>
    %184 = arith.mulf %183, %182 : vector<8x128xf32>
    %185 = arith.mulf %184, %160 : vector<8x128xf32>
    %c6_i32 = arith.constant 6 : i32
    %186 = arith.index_cast %c6_i32 : i32 to index
    %c0_77 = arith.constant 0 : index
    %c0_78 = arith.constant 0 : index
    %187 = vector.load %arg3[%186, %c0_77, %c0_78] : memref<8x8x128xf32, #tpu.memory_space<vmem>>, vector<1x8x128xf32>
    %188 = vector.shape_cast %187 : vector<1x8x128xf32> to vector<8x128xf32>
    %cst_79 = arith.constant dense<0.000000e+00> : vector<8x128xf32>
    %189 = tpu.matmul %185, %4, %cst_79 {dimension_numbers = #tpu.dot_dimension_numbers<[1], [0], [0], [1], [0, 0, 1, 1], [], []>} : vector<8x128xf32>, vector<128x128xf32>, vector<8x128xf32> -> vector<8x128xf32>
    %190 = arith.addf %188, %189 : vector<8x128xf32>
    %cst_80 = arith.constant 5.000000e-01 : f32
    %191 = vector.broadcast %cst_80 : f32 to vector<8x128xf32>
    %192 = arith.cmpf ogt, %190, %191 : vector<8x128xf32>
    %193 = arith.extui %192 : vector<8x128xi1> to vector<8x128xi32>
    %194 = arith.sitofp %193 : vector<8x128xi32> to vector<8x128xf32>
    %cst_81 = arith.constant 0.000000e+00 : f32
    %195 = vector.broadcast %cst_81 : f32 to vector<8x128xf32>
    %196 = arith.cmpf ogt, %190, %195 : vector<8x128xf32>
    %cst_82 = arith.constant 0.000000e+00 : f32
    %197 = vector.broadcast %cst_82 : f32 to vector<8x128xf32>
    %198 = arith.minimumf %190, %197 : vector<8x128xf32>
    %199 = math.exp %198 : vector<8x128xf32>
    %cst_83 = arith.constant 1.000000e+00 : f32
    %200 = vector.broadcast %cst_83 : f32 to vector<8x128xf32>
    %201 = arith.subf %199, %200 : vector<8x128xf32>
    %cst_84 = arith.constant 1.67326319 : f32
    %202 = vector.broadcast %cst_84 : f32 to vector<8x128xf32>
    %203 = arith.mulf %202, %201 : vector<8x128xf32>
    %204 = arith.select %196, %190, %203 : vector<8x128xi1>, vector<8x128xf32>
    %cst_85 = arith.constant 1.05070102 : f32
    %205 = vector.broadcast %cst_85 : f32 to vector<8x128xf32>
    %206 = arith.mulf %205, %204 : vector<8x128xf32>
    %207 = arith.index_cast %c6_i32 : i32 to index
    %c0_86 = arith.constant 0 : index
    %c0_87 = arith.constant 0 : index
    %208 = vector.load %arg5[%207, %c0_86, %c0_87] : memref<8x8x128xf32, #tpu.memory_space<vmem>>, vector<1x8x128xf32>
    %209 = vector.shape_cast %208 : vector<1x8x128xf32> to vector<8x128xf32>
    %210 = vector.shape_cast %206 : vector<8x128xf32> to vector<1x8x128xf32>
    tpu.vector_store %arg5[%207, %c0_86, %c0_87], %210 {strides = array<i32>} : memref<8x8x128xf32, #tpu.memory_space<vmem>>, vector<1x8x128xf32>,
    %cst_88 = arith.constant 1.000000e+00 : f32
    %211 = vector.broadcast %cst_88 : f32 to vector<8x128xf32>
    %212 = arith.subf %211, %194 : vector<8x128xf32>
    %213 = vector.broadcast %3 : f32 to vector<8x128xf32>
    %214 = arith.mulf %213, %212 : vector<8x128xf32>
    %215 = arith.mulf %214, %190 : vector<8x128xf32>
    %c7_i32 = arith.constant 7 : i32
    %216 = arith.index_cast %c7_i32 : i32 to index
    %c0_89 = arith.constant 0 : index
    %c0_90 = arith.constant 0 : index
    %217 = vector.load %arg3[%216, %c0_89, %c0_90] : memref<8x8x128xf32, #tpu.memory_space<vmem>>, vector<1x8x128xf32>
    %218 = vector.shape_cast %217 : vector<1x8x128xf32> to vector<8x128xf32>
    %cst_91 = arith.constant dense<0.000000e+00> : vector<8x128xf32>
    %219 = tpu.matmul %215, %4, %cst_91 {dimension_numbers = #tpu.dot_dimension_numbers<[1], [0], [0], [1], [0, 0, 1, 1], [], []>} : vector<8x128xf32>, vector<128x128xf32>, vector<8x128xf32> -> vector<8x128xf32>
    %220 = arith.addf %218, %219 : vector<8x128xf32>
    %cst_92 = arith.constant 5.000000e-01 : f32
    %221 = vector.broadcast %cst_92 : f32 to vector<8x128xf32>
    %222 = arith.cmpf ogt, %220, %221 : vector<8x128xf32>
    %223 = arith.extui %222 : vector<8x128xi1> to vector<8x128xi32>
    %224 = arith.sitofp %223 : vector<8x128xi32> to vector<8x128xf32>
    %cst_93 = arith.constant 0.000000e+00 : f32
    %225 = vector.broadcast %cst_93 : f32 to vector<8x128xf32>
    %226 = arith.cmpf ogt, %220, %225 : vector<8x128xf32>
    %cst_94 = arith.constant 0.000000e+00 : f32
    %227 = vector.broadcast %cst_94 : f32 to vector<8x128xf32>
    %228 = arith.minimumf %220, %227 : vector<8x128xf32>
    %229 = math.exp %228 : vector<8x128xf32>
    %cst_95 = arith.constant 1.000000e+00 : f32
    %230 = vector.broadcast %cst_95 : f32 to vector<8x128xf32>
    %231 = arith.subf %229, %230 : vector<8x128xf32>
    %cst_96 = arith.constant 1.67326319 : f32
    %232 = vector.broadcast %cst_96 : f32 to vector<8x128xf32>
    %233 = arith.mulf %232, %231 : vector<8x128xf32>
    %234 = arith.select %226, %220, %233 : vector<8x128xi1>, vector<8x128xf32>
    %cst_97 = arith.constant 1.05070102 : f32
    %235 = vector.broadcast %cst_97 : f32 to vector<8x128xf32>
    %236 = arith.mulf %235, %234 : vector<8x128xf32>
    %237 = arith.index_cast %c7_i32 : i32 to index
    %c0_98 = arith.constant 0 : index
    %c0_99 = arith.constant 0 : index
    %238 = vector.load %arg5[%237, %c0_98, %c0_99] : memref<8x8x128xf32, #tpu.memory_space<vmem>>, vector<1x8x128xf32>
    %239 = vector.shape_cast %238 : vector<1x8x128xf32> to vector<8x128xf32>
    %240 = vector.shape_cast %236 : vector<8x128xf32> to vector<1x8x128xf32>
    tpu.vector_store %arg5[%237, %c0_98, %c0_99], %240 {strides = array<i32>} : memref<8x8x128xf32, #tpu.memory_space<vmem>>, vector<1x8x128xf32>,
    %cst_100 = arith.constant 1.000000e+00 : f32
    %241 = vector.broadcast %cst_100 : f32 to vector<8x128xf32>
    %242 = arith.subf %241, %224 : vector<8x128xf32>
    %243 = vector.broadcast %3 : f32 to vector<8x128xf32>
    %244 = arith.mulf %243, %242 : vector<8x128xf32>
    %245 = arith.mulf %244, %220 : vector<8x128xf32>
    %c8_i32 = arith.constant 8 : i32
    %c0_101 = arith.constant 0 : index
    %c0_102 = arith.constant 0 : index
    %246 = vector.load %arg6[%c0_101, %c0_102] : memref<8x128xf32, #tpu.memory_space<vmem>>, vector<8x128xf32>
    tpu.vector_store %arg6[%c0_101, %c0_102], %245 {strides = array<i32>} : memref<8x128xf32, #tpu.memory_space<vmem>>, vector<8x128xf32>,
    return
  }
  func.func @transform_0(%arg0: i32, %arg1: i32, %arg2: memref<1xf32, #tpu.memory_space<smem>>) -> (i32, i32, i32) {
    %c0_i32 = arith.constant 0 : i32
    %c0_i32_0 = arith.constant 0 : i32
    return %arg1, %arg0, %c0_i32 : i32, i32, i32
  }
  func.func @transform_1(%arg0: i32, %arg1: i32, %arg2: memref<1xf32, #tpu.memory_space<smem>>) -> (i32, i32) {
    %c0_i32 = arith.constant 0 : i32
    %c0_i32_0 = arith.constant 0 : i32
    %c0_i32_1 = arith.constant 0 : i32
    return %c0_i32, %c0_i32_0 : i32, i32
  }
  func.func @transform_2(%arg0: i32, %arg1: i32, %arg2: memref<1xf32, #tpu.memory_space<smem>>) -> (i32, i32, i32) {
    %c0_i32 = arith.constant 0 : i32
    %c0_i32_0 = arith.constant 0 : i32
    return %arg1, %arg0, %c0_i32 : i32, i32, i32
  }
}

</mosaic_0001>

<llo_original>
// kernel: liafr_cell_forward.1
$region0: #{liafr_cell_forward.1}
  #allocation0 [shape = 'u32[]', space=smem, size = 0x4, offset = 0x4, fixed_abs, tag = 'smem constant byte address 0x4 - core index']
  #allocation1 [shape = 'u32[72,128]{1,0:T(1,128)}', space=vmem, size = 0x9000, scoped, tag = 'internal scratch']
  #allocation2 [shape = 'f32[8,128]{1,0:T(8,128)}', space=vmem, size = 0x1000, scoped, tag = 'scratch operand']
  #allocation3 [shape = 's32[1]{0}', space=sflag, size = 0x4, scoped, tag = 'scoped memory for liafr_cell_forward.1']
  #allocation4 [shape = 'f32[1]{0:T(128)S(6)}', space=smem, size = 0x200, scoped, tag = 'prefetched SMEM operand 0']
  %s0 = inlined_call_operand.<no memory space> [shape: f32[1], index: 0, kind: input, shape index: {}]
  %s1 = inlined_call_operand.vmem [shape: f32[8,8,128], index: 1, kind: input, shape index: {}]
  %s2 = inlined_call_operand.vmem [shape: f32[128,128], index: 2, kind: input, shape index: {}]
  %s3 = inlined_call_operand.vmem [shape: f32[8,8,128], index: 3, kind: output, shape index: {}]
  %s4 = sld [smem:[#allocation0]]
  $region22: #{liafr_cell_forward.1} parent=0
    _
  %s6 = ssub.s32 1, %s4
  %s7 = scalar_select 0, %s6, %s4
  %8 = sst [smem:[#allocation4]] %s0
  // Predicated region
  $region2: #{liafr_cell_forward.1} parent=0 // pred_check
    _
  $region3: #{liafr_cell_forward.1} parent=0 // pred_check_branch
    %10 = sbr.rel (0) target = $region5
  $region4: #{liafr_cell_forward.1} parent=0 // pred_region
    _
  $region5: #{liafr_cell_forward.1} parent=0 // pred_fallthru
    _
  // Predicated region
  $region6: #{liafr_cell_forward.1} parent=0 // pred_check
    _
  $region7: #{liafr_cell_forward.1} parent=0 // pred_check_branch
    %12 = sbr.rel (0) target = $region9
  $region8: #{liafr_cell_forward.1} parent=0 // pred_region
    _
  $region9: #{liafr_cell_forward.1} parent=0 // pred_fallthru
    _
  %p13 = scmp.eq.s32.totalorder 0, 0
  // Predicated region
  $region10: #{liafr_cell_forward.1} parent=0 // pred_check
    %p14 = pneg %p13
  $region11: #{liafr_cell_forward.1} parent=0 // pred_check_branch
    %16 = sbr.rel (%p14) target = $region13
  $region12: #{liafr_cell_forward.1} parent=0 // pred_region
    %17 = vst [vmem:[#allocation2] sm:$0xff] 0.0
  $region13: #{liafr_cell_forward.1} parent=0 // pred_fallthru
    _
  %s18 = sld [smem:[#allocation4]]
  %v19 = vld [vmem:[%s2] sm:$0xff]
  %v20 = vld [vmem:[%s2 + $0x8] sm:$0xff]
  %v21 = vld [vmem:[%s2 + $0x10] sm:$0xff]
  %v22 = vld [vmem:[%s2 + $0x18] sm:$0xff]
  %v23 = vld [vmem:[%s2 + $0x20] sm:$0xff]
  %v24 = vld [vmem:[%s2 + $0x28] sm:$0xff]
  %v25 = vld [vmem:[%s2 + $0x30] sm:$0xff]
  %v26 = vld [vmem:[%s2 + $0x38] sm:$0xff]
  %v27 = vld [vmem:[%s2 + $0x40] sm:$0xff]
  %v28 = vld [vmem:[%s2 + $0x48] sm:$0xff]
  %v29 = vld [vmem:[%s2 + $0x50] sm:$0xff]
  %v30 = vld [vmem:[%s2 + $0x58] sm:$0xff]
  %v31 = vld [vmem:[%s2 + $0x60] sm:$0xff]
  %v32 = vld [vmem:[%s2 + $0x68] sm:$0xff]
  %v33 = vld [vmem:[%s2 + $0x70] sm:$0xff]
  %v34 = vld [vmem:[%s2 + $0x78] sm:$0xff]
  %v35 = vld [vmem:[#allocation2] sm:$0xff]
  %v36 = vld [vmem:[%s1] sm:$0xff]
  %37 = vmatpush.msra.mxu0 %v34
  %38 = vmatpush.msra.mxu0 %v33
  %39 = vmatpush.msra.mxu0 %v32
  %40 = vmatpush.msra.mxu0 %v31
  %41 = vmatpush.msra.mxu0 %v30
  %42 = vmatpush.msra.mxu0 %v29
  %43 = vmatpush.msra.mxu0 %v28
  %44 = vmatpush.msra.mxu0 %v27
  %45 = vmatpush.msra.mxu0 %v26
  %46 = vmatpush.msra.mxu0 %v25
  %47 = vmatpush.msra.mxu0 %v24
  %48 = vmatpush.msra.mxu0 %v23
  %49 = vmatpush.msra.mxu0 %v22
  %50 = vmatpush.msra.mxu0 %v21
  %51 = vmatpush.msra.mxu0 %v20
  %52 = vmatpush.msra.mxu0 %v19
  %53 = vmatmul.f32.gmra.mxu0 %v35
  %v54 = vpop.f32.mrf.mxu0
  %v55 = vadd.f32 0.0, %v54
  %56 = vdwg.mxu0
  %v57 = vadd.f32 %v36, %v55
  %vm58 = vcmp.gt.f32.partialorder %v57, 0.5
  %v59 = vsel %vm58, 1, 0
  %v60 = vcvt.s32.f32 %v59
  %vm61 = vcmp.gt.f32.partialorder %v57, 0.0
  %v62 = vmin.f32 %v57, 0.0
  %v63 = vmul.f32 %v62, 1.442695
  %v64 = vpow.pop %v63
  %v65 = vsub.f32 %v64, 1.0
  %v66 = vmul.f32 %v65, 1.6732632
  %v67 = vsel %vm61, %v57, %v66
  %v68 = vmul.f32 %v67, 1.050701
  %69 = vst [vmem:[%s3] sm:$0xff] %v68
  %v70 = vsub.f32 1.0, %v60
  %v71 = vstv %s18
  %v72 = vmul.f32 %v71, %v70
  %v73 = vmul.f32 %v72, %v57
  %s74 = scalar_lea.vmem %s1, 8
  %v75 = vld [vmem:[%s74] sm:$0xff]
  %76 = vmatpush.msra.mxu0 %v34
  %77 = vmatpush.msra.mxu0 %v33
  %78 = vmatpush.msra.mxu0 %v32
  %79 = vmatpush.msra.mxu0 %v31
  %80 = vmatpush.msra.mxu0 %v30
  %81 = vmatpush.msra.mxu0 %v29
  %82 = vmatpush.msra.mxu0 %v28
  %83 = vmatpush.msra.mxu0 %v27
  %84 = vmatpush.msra.mxu0 %v26
  %85 = vmatpush.msra.mxu0 %v25
  %86 = vmatpush.msra.mxu0 %v24
  %87 = vmatpush.msra.mxu0 %v23
  %88 = vmatpush.msra.mxu0 %v22
  %89 = vmatpush.msra.mxu0 %v21
  %90 = vmatpush.msra.mxu0 %v20
  %91 = vmatpush.msra.mxu0 %v19
  %92 = vmatmul.f32.gmra.mxu0 %v73
  %v93 = vpop.f32.mrf.mxu0
  %v94 = vadd.f32 0.0, %v93
  %95 = vdwg.mxu0
  %v96 = vadd.f32 %v75, %v94
  %vm97 = vcmp.gt.f32.partialorder %v96, 0.5
  %v98 = vsel %vm97, 1, 0
  %v99 = vcvt.s32.f32 %v98
  %vm100 = vcmp.gt.f32.partialorder %v96, 0.0
  %v101 = vmin.f32 %v96, 0.0
  %v102 = vmul.f32 %v101, 1.442695
  %v103 = vpow.pop %v102
  %v104 = vsub.f32 %v103, 1.0
  %v105 = vmul.f32 %v104, 1.6732632
  %v106 = vsel %vm100, %v96, %v105
  %v107 = vmul.f32 %v106, 1.050701
  %s108 = scalar_lea.vmem %s3, 8
  %109 = vst [vmem:[%s108] sm:$0xff] %v107
  %v110 = vsub.f32 1.0, %v99
  %v111 = vmul.f32 %v71, %v110
  %v112 = vmul.f32 %v111, %v96
  %s113 = scalar_lea.vmem %s1, 16
  %v114 = vld [vmem:[%s113] sm:$0xff]
  %115 = vmatpush.msra.mxu0 %v34
  %116 = vmatpush.msra.mxu0 %v33
  %117 = vmatpush.msra.mxu0 %v32
  %118 = vmatpush.msra.mxu0 %v31
  %119 = vmatpush.msra.mxu0 %v30
  %120 = vmatpush.msra.mxu0 %v29
  %121 = vmatpush.msra.mxu0 %v28
  %122 = vmatpush.msra.mxu0 %v27
  %123 = vmatpush.msra.mxu0 %v26
  %124 = vmatpush.msra.mxu0 %v25
  %125 = vmatpush.msra.mxu0 %v24
  %126 = vmatpush.msra.mxu0 %v23
  %127 = vmatpush.msra.mxu0 %v22
  %128 = vmatpush.msra.mxu0 %v21
  %129 = vmatpush.msra.mxu0 %v20
  %130 = vmatpush.msra.mxu0 %v19
  %131 = vmatmul.f32.gmra.mxu0 %v112
  %v132 = vpop.f32.mrf.mxu0
  %v133 = vadd.f32 0.0, %v132
  %134 = vdwg.mxu0
  %v135 = vadd.f32 %v114, %v133
  %vm136 = vcmp.gt.f32.partialorder %v135, 0.5
  %v137 = vsel %vm136, 1, 0
  %v138 = vcvt.s32.f32 %v137
  %vm139 = vcmp.gt.f32.partialorder %v135, 0.0
  %v140 = vmin.f32 %v135, 0.0
  %v141 = vmul.f32 %v140, 1.442695
  %v142 = vpow.pop %v141
  %v143 = vsub.f32 %v142, 1.0
  %v144 = vmul.f32 %v143, 1.6732632
  %v145 = vsel %vm139, %v135, %v144
  %v146 = vmul.f32 %v145, 1.050701
  %s147 = scalar_lea.vmem %s3, 16
  %148 = vst [vmem:[%s147] sm:$0xff] %v146
  %v149 = vsub.f32 1.0, %v138
  %v150 = vmul.f32 %v71, %v149
  %v151 = vmul.f32 %v150, %v135
  %s152 = scalar_lea.vmem %s1, 24
  %v153 = vld [vmem:[%s152] sm:$0xff]
  %154 = vmatpush.msra.mxu0 %v34
  %155 = vmatpush.msra.mxu0 %v33
  %156 = vmatpush.msra.mxu0 %v32
  %157 = vmatpush.msra.mxu0 %v31
  %158 = vmatpush.msra.mxu0 %v30
  %159 = vmatpush.msra.mxu0 %v29
  %160 = vmatpush.msra.mxu0 %v28
  %161 = vmatpush.msra.mxu0 %v27
  %162 = vmatpush.msra.mxu0 %v26
  %163 = vmatpush.msra.mxu0 %v25
  %164 = vmatpush.msra.mxu0 %v24
  %165 = vmatpush.msra.mxu0 %v23
  %166 = vmatpush.msra.mxu0 %v22
  %167 = vmatpush.msra.mxu0 %v21
  %168 = vmatpush.msra.mxu0 %v20
  %169 = vmatpush.msra.mxu0 %v19
  %170 = vmatmul.f32.gmra.mxu0 %v151
  %v171 = vpop.f32.mrf.mxu0
  %v172 = vadd.f32 0.0, %v171
  %173 = vdwg.mxu0
  %v174 = vadd.f32 %v153, %v172
  %vm175 = vcmp.gt.f32.partialorder %v174, 0.5
  %v176 = vsel %vm175, 1, 0
  %v177 = vcvt.s32.f32 %v176
  %vm178 = vcmp.gt.f32.partialorder %v174, 0.0
  %v179 = vmin.f32 %v174, 0.0
  %v180 = vmul.f32 %v179, 1.442695
  %v181 = vpow.pop %v180
  %v182 = vsub.f32 %v181, 1.0
  %v183 = vmul.f32 %v182, 1.6732632
  %v184 = vsel %vm178, %v174, %v183
  %v185 = vmul.f32 %v184, 1.050701
  %s186 = scalar_lea.vmem %s3, 24
  %187 = vst [vmem:[%s186] sm:$0xff] %v185
  %v188 = vsub.f32 1.0, %v177
  %v189 = vmul.f32 %v71, %v188
  %v190 = vmul.f32 %v189, %v174
  %s191 = scalar_lea.vmem %s1, 32
  %v192 = vld [vmem:[%s191] sm:$0xff]
  %193 = vmatpush.msra.mxu0 %v34
  %194 = vmatpush.msra.mxu0 %v33
  %195 = vmatpush.msra.mxu0 %v32
  %196 = vmatpush.msra.mxu0 %v31
  %197 = vmatpush.msra.mxu0 %v30
  %198 = vmatpush.msra.mxu0 %v29
  %199 = vmatpush.msra.mxu0 %v28
  %200 = vmatpush.msra.mxu0 %v27
  %201 = vmatpush.msra.mxu0 %v26
  %202 = vmatpush.msra.mxu0 %v25
  %203 = vmatpush.msra.mxu0 %v24
  %204 = vmatpush.msra.mxu0 %v23
  %205 = vmatpush.msra.mxu0 %v22
  %206 = vmatpush.msra.mxu0 %v21
  %207 = vmatpush.msra.mxu0 %v20
  %208 = vmatpush.msra.mxu0 %v19
  %209 = vmatmul.f32.gmra.mxu0 %v190
  %v210 = vpop.f32.mrf.mxu0
  %v211 = vadd.f32 0.0, %v210
  %212 = vdwg.mxu0
  %v213 = vadd.f32 %v192, %v211
  %vm214 = vcmp.gt.f32.partialorder %v213, 0.5
  %v215 = vsel %vm214, 1, 0
  %v216 = vcvt.s32.f32 %v215
  %vm217 = vcmp.gt.f32.partialorder %v213, 0.0
  %v218 = vmin.f32 %v213, 0.0
  %v219 = vmul.f32 %v218, 1.442695
  %v220 = vpow.pop %v219
  %v221 = vsub.f32 %v220, 1.0
  %v222 = vmul.f32 %v221, 1.6732632
  %v223 = vsel %vm217, %v213, %v222
  %v224 = vmul.f32 %v223, 1.050701
  %s225 = scalar_lea.vmem %s3, 32
  %226 = vst [vmem:[%s225] sm:$0xff] %v224
  %v227 = vsub.f32 1.0, %v216
  %v228 = vmul.f32 %v71, %v227
  %v229 = vmul.f32 %v228, %v213
  %s230 = scalar_lea.vmem %s1, 40
  %v231 = vld [vmem:[%s230] sm:$0xff]
  %232 = vmatpush.msra.mxu0 %v34
  %233 = vmatpush.msra.mxu0 %v33
  %234 = vmatpush.msra.mxu0 %v32
  %235 = vmatpush.msra.mxu0 %v31
  %236 = vmatpush.msra.mxu0 %v30
  %237 = vmatpush.msra.mxu0 %v29
  %238 = vmatpush.msra.mxu0 %v28
  %239 = vmatpush.msra.mxu0 %v27
  %240 = vmatpush.msra.mxu0 %v26
  %241 = vmatpush.msra.mxu0 %v25
  %242 = vmatpush.msra.mxu0 %v24
  %243 = vmatpush.msra.mxu0 %v23
  %244 = vmatpush.msra.mxu0 %v22
  %245 = vmatpush.msra.mxu0 %v21
  %246 = vmatpush.msra.mxu0 %v20
  %247 = vmatpush.msra.mxu0 %v19
  %248 = vmatmul.f32.gmra.mxu0 %v229
  %v249 = vpop.f32.mrf.mxu0
  %v250 = vadd.f32 0.0, %v249
  %251 = vdwg.mxu0
  %v252 = vadd.f32 %v231, %v250
  %vm253 = vcmp.gt.f32.partialorder %v252, 0.5
  %v254 = vsel %vm253, 1, 0
  %v255 = vcvt.s32.f32 %v254
  %vm256 = vcmp.gt.f32.partialorder %v252, 0.0
  %v257 = vmin.f32 %v252, 0.0
  %v258 = vmul.f32 %v257, 1.442695
  %v259 = vpow.pop %v258
  %v260 = vsub.f32 %v259, 1.0
  %v261 = vmul.f32 %v260, 1.6732632
  %v262 = vsel %vm256, %v252, %v261
  %v263 = vmul.f32 %v262, 1.050701
  %s264 = scalar_lea.vmem %s3, 40
  %265 = vst [vmem:[%s264] sm:$0xff] %v263
  %v266 = vsub.f32 1.0, %v255
  %v267 = vmul.f32 %v71, %v266
  %v268 = vmul.f32 %v267, %v252
  %s269 = scalar_lea.vmem %s1, 48
  %v270 = vld [vmem:[%s269] sm:$0xff]
  %271 = vmatpush.msra.mxu0 %v34
  %272 = vmatpush.msra.mxu0 %v33
  %273 = vmatpush.msra.mxu0 %v32
  %274 = vmatpush.msra.mxu0 %v31
  %275 = vmatpush.msra.mxu0 %v30
  %276 = vmatpush.msra.mxu0 %v29
  %277 = vmatpush.msra.mxu0 %v28
  %278 = vmatpush.msra.mxu0 %v27
  %279 = vmatpush.msra.mxu0 %v26
  %280 = vmatpush.msra.mxu0 %v25
  %281 = vmatpush.msra.mxu0 %v24
  %282 = vmatpush.msra.mxu0 %v23
  %283 = vmatpush.msra.mxu0 %v22
  %284 = vmatpush.msra.mxu0 %v21
  %285 = vmatpush.msra.mxu0 %v20
  %286 = vmatpush.msra.mxu0 %v19
  %287 = vmatmul.f32.gmra.mxu0 %v268
  %v288 = vpop.f32.mrf.mxu0
  %v289 = vadd.f32 0.0, %v288
  %290 = vdwg.mxu0
  %v291 = vadd.f32 %v270, %v289
  %vm292 = vcmp.gt.f32.partialorder %v291, 0.5
  %v293 = vsel %vm292, 1, 0
  %v294 = vcvt.s32.f32 %v293
  %vm295 = vcmp.gt.f32.partialorder %v291, 0.0
  %v296 = vmin.f32 %v291, 0.0
  %v297 = vmul.f32 %v296, 1.442695
  %v298 = vpow.pop %v297
  %v299 = vsub.f32 %v298, 1.0
  %v300 = vmul.f32 %v299, 1.6732632
  %v301 = vsel %vm295, %v291, %v300
  %v302 = vmul.f32 %v301, 1.050701
  %s303 = scalar_lea.vmem %s3, 48
  %304 = vst [vmem:[%s303] sm:$0xff] %v302
  %v305 = vsub.f32 1.0, %v294
  %v306 = vmul.f32 %v71, %v305
  %v307 = vmul.f32 %v306, %v291
  %s308 = scalar_lea.vmem %s1, 56
  %v309 = vld [vmem:[%s308] sm:$0xff]
  %310 = vmatpush.msra.mxu0 %v34
  %311 = vmatpush.msra.mxu0 %v33
  %312 = vmatpush.msra.mxu0 %v32
  %313 = vmatpush.msra.mxu0 %v31
  %314 = vmatpush.msra.mxu0 %v30
  %315 = vmatpush.msra.mxu0 %v29
  %316 = vmatpush.msra.mxu0 %v28
  %317 = vmatpush.msra.mxu0 %v27
  %318 = vmatpush.msra.mxu0 %v26
  %319 = vmatpush.msra.mxu0 %v25
  %320 = vmatpush.msra.mxu0 %v24
  %321 = vmatpush.msra.mxu0 %v23
  %322 = vmatpush.msra.mxu0 %v22
  %323 = vmatpush.msra.mxu0 %v21
  %324 = vmatpush.msra.mxu0 %v20
  %325 = vmatpush.msra.mxu0 %v19
  %326 = vmatmul.f32.gmra.mxu0 %v307
  %v327 = vpop.f32.mrf.mxu0
  %v328 = vadd.f32 0.0, %v327
  %329 = vdwg.mxu0
  %v330 = vadd.f32 %v309, %v328
  %vm331 = vcmp.gt.f32.partialorder %v330, 0.5
  %v332 = vsel %vm331, 1, 0
  %v333 = vcvt.s32.f32 %v332
  %vm334 = vcmp.gt.f32.partialorder %v330, 0.0
  %v335 = vmin.f32 %v330, 0.0
  %v336 = vmul.f32 %v335, 1.442695
  %v337 = vpow.pop %v336
  %v338 = vsub.f32 %v337, 1.0
  %v339 = vmul.f32 %v338, 1.6732632
  %v340 = vsel %vm334, %v330, %v339
  %v341 = vmul.f32 %v340, 1.050701
  %s342 = scalar_lea.vmem %s3, 56
  %343 = vst [vmem:[%s342] sm:$0xff] %v341
  %v344 = vsub.f32 1.0, %v333
  %v345 = vmul.f32 %v71, %v344
  %v346 = vmul.f32 %v345, %v330
  %347 = vst [vmem:[#allocation2] sm:$0xff] %v346
  // Predicated region
  $region14: #{liafr_cell_forward.1} parent=0 // pred_check
    _
  $region15: #{liafr_cell_forward.1} parent=0 // pred_check_branch
    %349 = sbr.rel (0) target = $region17
  $region16: #{liafr_cell_forward.1} parent=0 // pred_region
    _
  $region17: #{liafr_cell_forward.1} parent=0 // pred_fallthru
    _
  // Predicated region
  $region18: #{liafr_cell_forward.1} parent=0 // pred_check
    _
  $region19: #{liafr_cell_forward.1} parent=0 // pred_check_branch
    %351 = sbr.rel (0) target = $region21
  $region20: #{liafr_cell_forward.1} parent=0 // pred_region
    _
  $region21: #{liafr_cell_forward.1} parent=0 // pred_fallthru
    _

</llo_original>
